<compile_context>
chip_gen: v7x
topology: tpu7x:2x2x1
jax: 0.10.0
libtpu: 0.0.40
codegen_flags: <defaults>
</compile_context>

<pallas_src>
import functools

import numpy as np
import jax
import jax.numpy as jnp
from jax.experimental import pallas as pl
from jax.experimental.pallas import tpu as pltpu


def _build_moving_avg_matrix(seq_len: int, kernel_size: int) -> np.ndarray:
    """Dense (L, L) matrix A with A @ x == AvgPool1d(ramp_pad(x), k, stride=1)."""
    assert kernel_size % 2 == 1, "series_decomp assumes an odd kernel_size"
    assert seq_len >= 2
    L, k = seq_len, kernel_size
    pad = (k - 1) // 2
    # P maps original rows -> padded rows (length L + 2*pad).
    P = np.zeros((L + 2 * pad, L), np.float64)
    for i in range(pad):                       # front: x0 + (x1-x0)/(pad+1)*(i+1)
        w = (i + 1) / (pad + 1)
        P[i, 0] = 1.0 - w
        P[i, 1] = w
    P[pad:pad + L, :] = np.eye(L)
    for j in range(pad):                       # back: x[-1] - (x[-1]-x[-2])/(pad+1)*j
        w = j / (pad + 1)
        P[pad + L + j, L - 1] = 1.0 - w
        P[pad + L + j, L - 2] = w
    # W is the length-k windowed mean (stride 1, no extra padding).
    W = np.zeros((L, L + 2 * pad), np.float64)
    for l in range(L):
        W[l, l:l + k] = 1.0 / k
    return np.asarray(W @ P, np.float32)


def _decomp_kernel(a_ref, x_ref, res_ref, mean_ref):
    x = x_ref[0]                                           # (L, D) f32
    # Banded averaging matrix on the MXU replaces the 25-way shifted-add.
    mean = jnp.dot(a_ref[...], x, preferred_element_type=jnp.float32)
    mean_ref[0] = mean
    res_ref[0] = x - mean


@functools.partial(jax.jit, static_argnums=1)
def series_decomp(x, kernel_size):
    """x: (B, L, D) float32 -> (res, moving_mean), each (B, L, D) float32."""
    B, L, D = x.shape
    a = jnp.asarray(_build_moving_avg_matrix(L, kernel_size))
    res, mean = pl.pallas_call(
        _decomp_kernel,
        out_shape=(jax.ShapeDtypeStruct((B, L, D), jnp.float32),
                   jax.ShapeDtypeStruct((B, L, D), jnp.float32)),
        grid=(B,),
        in_specs=[
            pl.BlockSpec((L, L), lambda b: (0, 0)),        # A: same block every step
            pl.BlockSpec((1, L, D), lambda b: (b, 0, 0)),  # per-batch slab
        ],
        out_specs=(pl.BlockSpec((1, L, D), lambda b: (b, 0, 0)),
                   pl.BlockSpec((1, L, D), lambda b: (b, 0, 0))),
        compiler_params=pltpu.CompilerParams(
            dimension_semantics=("parallel",)),            # B>=2 keeps both v7x cores busy
    )(a, x)
    return res, mean


def _series_decomp_ref(x, kernel_size):
    """Pure-JAX mirror of the PyTorch module, used only for verification."""
    pad = (kernel_size - 1) // 2
    start = x[:, :1, :]
    end = x[:, -1:, :]
    start_diff = (x[:, 1:2, :] - start) / (pad + 1)
    end_diff = (end - x[:, -2:-1, :]) / (pad + 1)
    front = jnp.concatenate(
        [start + start_diff * (i + 1) for i in range(pad)], axis=1)
    back = jnp.concatenate(
        [end - end_diff * (pad - i) for i in range(pad, 0, -1)], axis=1)
    xp = jnp.concatenate([front, x, back], axis=1)
    L = x.shape[1]
    windows = jnp.stack([xp[:, j:j + L, :] for j in range(kernel_size)], axis=0)
    mean = jnp.mean(windows, axis=0)
    return x - mean, mean


if __name__ == "__main__":
    B, L, D = 2, 96, 128          # lane-dense feature dim (multiple of 128)
    kernel_size = 25              # Autoformer default moving_avg window

    x = jax.random.normal(jax.random.PRNGKey(0), (B, L, D), jnp.float32)

    res, mean = series_decomp(x, kernel_size)
    jax.block_until_ready((res, mean))

    assert res.shape == (B, L, D) and mean.shape == (B, L, D)

    # Verify against a pure-JAX reference of the PyTorch forward pass.
    res_ref, mean_ref = _series_decomp_ref(x, kernel_size)
    assert float(jnp.max(jnp.abs(mean - mean_ref))) < 5e-3
    assert float(jnp.max(jnp.abs(res - res_ref))) < 5e-3

    print("KERNEL_OK")
</pallas_src>

<mosaic_0001>
module attributes {stable_mosaic.version = 11 : i64} {
  func.func @_decomp_kernel(%arg0: i32, %arg1: memref<96x96xf32, #tpu.memory_space<vmem>>, %arg2: memref<1x96x128xf32, #tpu.memory_space<vmem>>, %arg3: memref<1x96x128xf32, #tpu.memory_space<vmem>>, %arg4: memref<1x96x128xf32, #tpu.memory_space<vmem>>) attributes {dimension_semantics = [#tpu.dimension_semantics<parallel>], iteration_bounds = array<i64: 2>, scalar_prefetch = 0 : i64, scratch_operands = 0 : i64, tpu.core_type = #tpu.core_type<tc>, window_params = [{pipeline_mode = #tpu.pipeline_mode<synchronous>, transform_indices = @transform_0, window_bounds = array<i64: 96, 96>}, {transform_indices = @transform_1, window_bounds = array<i64: 1, 96, 128>}, {transform_indices = @transform_2, window_bounds = array<i64: 1, 96, 128>}, {transform_indices = @transform_3, window_bounds = array<i64: 1, 96, 128>}]} {
    %c0 = arith.constant 0 : index
    %c0_0 = arith.constant 0 : index
    %c0_1 = arith.constant 0 : index
    %0 = vector.load %arg2[%c0, %c0_0, %c0_1] : memref<1x96x128xf32, #tpu.memory_space<vmem>>, vector<1x96x128xf32>
    %1 = vector.shape_cast %0 : vector<1x96x128xf32> to vector<96x128xf32>
    %c0_2 = arith.constant 0 : index
    %c0_3 = arith.constant 0 : index
    %2 = vector.load %arg1[%c0_2, %c0_3] : memref<96x96xf32, #tpu.memory_space<vmem>>, vector<96x96xf32>
    %cst = arith.constant dense<0.000000e+00> : vector<96x128xf32>
    %3 = tpu.matmul %2, %1, %cst {dimension_numbers = #tpu.dot_dimension_numbers<[1], [0], [0], [1], [0, 0, 1, 1], [], []>} : vector<96x96xf32>, vector<96x128xf32>, vector<96x128xf32> -> vector<96x128xf32>
    %c0_4 = arith.constant 0 : index
    %c0_5 = arith.constant 0 : index
    %c0_6 = arith.constant 0 : index
    %4 = vector.load %arg4[%c0_4, %c0_5, %c0_6] : memref<1x96x128xf32, #tpu.memory_space<vmem>>, vector<1x96x128xf32>
    %5 = vector.shape_cast %4 : vector<1x96x128xf32> to vector<96x128xf32>
    %6 = vector.shape_cast %3 : vector<96x128xf32> to vector<1x96x128xf32>
    tpu.vector_store %arg4[%c0_4, %c0_5, %c0_6], %6 {strides = array<i32>} : memref<1x96x128xf32, #tpu.memory_space<vmem>>, vector<1x96x128xf32>,
    %7 = arith.subf %1, %3 : vector<96x128xf32>
    %c0_7 = arith.constant 0 : index
    %c0_8 = arith.constant 0 : index
    %c0_9 = arith.constant 0 : index
    %8 = vector.load %arg3[%c0_7, %c0_8, %c0_9] : memref<1x96x128xf32, #tpu.memory_space<vmem>>, vector<1x96x128xf32>
    %9 = vector.shape_cast %8 : vector<1x96x128xf32> to vector<96x128xf32>
    %10 = vector.shape_cast %7 : vector<96x128xf32> to vector<1x96x128xf32>
    tpu.vector_store %arg3[%c0_7, %c0_8, %c0_9], %10 {strides = array<i32>} : memref<1x96x128xf32, #tpu.memory_space<vmem>>, vector<1x96x128xf32>,
    return
  }
  func.func @transform_0(%arg0: i32) -> (i32, i32) {
    %c0_i32 = arith.constant 0 : i32
    %c0_i32_0 = arith.constant 0 : i32
    %c0_i32_1 = arith.constant 0 : i32
    return %c0_i32, %c0_i32_0 : i32, i32
  }
  func.func @transform_1(%arg0: i32) -> (i32, i32, i32) {
    %c0_i32 = arith.constant 0 : i32
    %c0_i32_0 = arith.constant 0 : i32
    %c0_i32_1 = arith.constant 0 : i32
    return %arg0, %c0_i32, %c0_i32_0 : i32, i32, i32
  }
  func.func @transform_2(%arg0: i32) -> (i32, i32, i32) {
    %c0_i32 = arith.constant 0 : i32
    %c0_i32_0 = arith.constant 0 : i32
    %c0_i32_1 = arith.constant 0 : i32
    return %arg0, %c0_i32, %c0_i32_0 : i32, i32, i32
  }
  func.func @transform_3(%arg0: i32) -> (i32, i32, i32) {
    %c0_i32 = arith.constant 0 : i32
    %c0_i32_0 = arith.constant 0 : i32
    %c0_i32_1 = arith.constant 0 : i32
    return %arg0, %c0_i32, %c0_i32_0 : i32, i32, i32
  }
}

</mosaic_0001>

<llo_original>
// kernel: series_decomp.1
$region0: #{series_decomp.1}
  #allocation0 [shape = 'u32[]', space=smem, size = 0x4, offset = 0x4, fixed_abs, tag = 'smem constant byte address 0x4 - core index']
  #allocation1 [shape = 'u32[144,128]{1,0:T(1,128)}', space=vmem, size = 0x12000, scoped, tag = 'internal scratch']
  %s0 = inlined_call_operand.hbm [shape: f32[96,96], index: 0, kind: input, shape index: {}]
  %s1 = inlined_call_operand.hbm [shape: f32[2,96,128], index: 1, kind: input, shape index: {}]
  %s2 = inlined_call_operand.hbm [shape: f32[2,96,128], index: 2, kind: output, shape index: {0}]
  %s3 = inlined_call_operand.hbm [shape: f32[2,96,128], index: 3, kind: output, shape index: {1}]
  %4 = xla_tuple %s2, %s3
  %s5 = sld [smem:[#allocation0]]
  $region57: #{series_decomp.1} parent=0
    _
  %s7 = ssub.s32 1, %s5
  %s8 = scalar_select 0, %s7, %s5
  $region1: #{series_decomp.1} parent=0
    #allocation2 [shape = 'u8[49152]{0}', space=vmem, size = 0xc000, scoped, tag = 'input window, operand 0, single buffered']
    #allocation3 [shape = 's32[2]{0}', space=sflag, size = 0x8, scoped, tag = 'scoped memory for series_decomp.1']
    #allocation4 [shape = 's32[2]{0}', space=sflag, size = 0x8, scoped, tag = 'scoped memory for series_decomp.1']
    #allocation5 [shape = 'u8[98304]{0}', space=vmem, size = 0x18000, scoped, tag = 'input window, operand 1']
    #allocation6 [shape = 's32[2]{0}', space=sflag, size = 0x8, scoped, tag = 'scoped memory for series_decomp.1']
    #allocation7 [shape = 'u8[98304]{0}', space=vmem, size = 0x18000, scoped, tag = 'output window, operand 0']
    #allocation8 [shape = 'u8[98304]{0}', space=vmem, size = 0x18000, scoped, tag = 'output window, operand 1']
    #allocation9 [shape = 's32[2]{0}', space=sflag, size = 0x8, scoped, tag = 'scoped memory for series_decomp.1']
    %9 = vsyncpa [#allocation3], 0
    %10 = vsyncpa [#allocation6], 0
    %s11 = scalar_lea.sflag [#allocation6], 1
    %12 = vsyncpa %s11, 0
    %13 = vsyncpa [#allocation4], 0
    %s14 = scalar_lea.sflag [#allocation4], 1
    %15 = vsyncpa %s14, 0
    %16 = vsyncpa [#allocation9], 0
    %s17 = scalar_lea.sflag [#allocation9], 1
    %18 = vsyncpa %s17, 0
    loop: start=0, step=1, limit=4
    $region2: #{series_decomp.1} parent=1 // loop_pre_header
      _
    $region3: #{series_decomp.1} parent=1 // loop_header
      %s20 = sphi 0, %s24
      %p21 = scmp.ge.s32.totalorder %s20, 4
      %s28 = sphi 0, %s28
      %s30 = sphi 0, %s28
      %s31 = sphi 0, %s30
      %s45 = sphi 0, %s31
      %s51 = sphi 0, %s53
      %s54 = sphi 0, %s51
      %s55 = sphi 0, %s54
      %s71 = sphi 0, %s55
      %s77 = sphi 0, %s79
      %s80 = sphi 0, %s77
      %s81 = sphi 0, %s80
      %s97 = sphi 0, %s81
      %s103 = sphi 0, %s105
      %s106 = sphi 0, %s103
      %s107 = sphi 0, %s106
      %s123 = sphi 0, %s107
    $region4: #{series_decomp.1} parent=1 // loop_header_branch
      %23 = sbr.rel (%p21) target = $region8
    $region5: #{series_decomp.1} parent=1 // loop_body
      %s25 = ssub.s32 %s20, 1
      %s26 = ssub.s32 %s20, 2
      %s27 = sadd.s32 %s20, 1
      %s29 = sadd.s32 %s28, 1
      %p32 = scmp.eq.s32.totalorder %s20, 1
      %p33 = scmp.ne.s32.totalorder %s28, %s30
      %p34 = scmp.eq.s32.totalorder %s20, 0
      %p35 = por %p33, %p34
      %p36 = scmp.ne.s32.totalorder %s28, %s30
      %p37 = scmp.eq.s32.totalorder %s25, 1
      %p38 = por %p36, %p37
      %p39 = scmp.ne.s32.totalorder %s30, %s31
      %p40 = scmp.eq.s32.totalorder %s25, 0
      %p41 = por %p39, %p40
      %p42 = scmp.ne.s32.totalorder %s30, %s31
      %p43 = scmp.eq.s32.totalorder %s26, 1
      %p44 = por %p42, %p43
      %p46 = scmp.ne.s32.totalorder %s31, %s45
      %p47 = scmp.eq.s32.totalorder %s26, 0
      %p48 = por %p46, %p47
      %s49 = ssub.s32 %s20, %s27
      %p50 = scmp.eq.s32.totalorder %s49, 0
      %s52 = sadd.s32 %s51, 1
      %s53 = scalar_select %p50, %s51, %s52
      %p56 = pneg %p50
      %p57 = scmp.eq.s32.totalorder %s20, 1
      %p58 = por %p56, %p57
      %p59 = scmp.ne.s32.totalorder %s51, %s54
      %p60 = scmp.eq.s32.totalorder %s20, 0
      %p61 = por %p59, %p60
      %p62 = scmp.ne.s32.totalorder %s51, %s54
      %p63 = scmp.eq.s32.totalorder %s25, 1
      %p64 = por %p62, %p63
      %p65 = scmp.ne.s32.totalorder %s54, %s55
      %p66 = scmp.eq.s32.totalorder %s25, 0
      %p67 = por %p65, %p66
      %p68 = scmp.ne.s32.totalorder %s54, %s55
      %p69 = scmp.eq.s32.totalorder %s26, 1
      %p70 = por %p68, %p69
      %p72 = scmp.ne.s32.totalorder %s55, %s71
      %p73 = scmp.eq.s32.totalorder %s26, 0
      %p74 = por %p72, %p73
      %s75 = ssub.s32 %s20, %s27
      %p76 = scmp.eq.s32.totalorder %s75, 0
      %s78 = sadd.s32 %s77, 1
      %s79 = scalar_select %p76, %s77, %s78
      %p82 = pneg %p76
      %p83 = scmp.eq.s32.totalorder %s20, 1
      %p84 = por %p82, %p83
      %p85 = scmp.ne.s32.totalorder %s77, %s80
      %p86 = scmp.eq.s32.totalorder %s20, 0
      %p87 = por %p85, %p86
      %p88 = scmp.ne.s32.totalorder %s77, %s80
      %p89 = scmp.eq.s32.totalorder %s25, 1
      %p90 = por %p88, %p89
      %p91 = scmp.ne.s32.totalorder %s80, %s81
      %p92 = scmp.eq.s32.totalorder %s25, 0
      %p93 = por %p91, %p92
      %p94 = scmp.ne.s32.totalorder %s80, %s81
      %p95 = scmp.eq.s32.totalorder %s26, 1
      %p96 = por %p94, %p95
      %p98 = scmp.ne.s32.totalorder %s81, %s97
      %p99 = scmp.eq.s32.totalorder %s26, 0
      %p100 = por %p98, %p99
      %s101 = ssub.s32 %s20, %s27
      %p102 = scmp.eq.s32.totalorder %s101, 0
      %s104 = sadd.s32 %s103, 1
      %s105 = scalar_select %p102, %s103, %s104
      %p108 = pneg %p102
      %p109 = scmp.eq.s32.totalorder %s20, 1
      %p110 = por %p108, %p109
      %p111 = scmp.ne.s32.totalorder %s103, %s106
      %p112 = scmp.eq.s32.totalorder %s20, 0
      %p113 = por %p111, %p112
      %p114 = scmp.ne.s32.totalorder %s103, %s106
      %p115 = scmp.eq.s32.totalorder %s25, 1
      %p116 = por %p114, %p115
      %p117 = scmp.ne.s32.totalorder %s106, %s107
      %p118 = scmp.eq.s32.totalorder %s25, 0
      %p119 = por %p117, %p118
      %p120 = scmp.ne.s32.totalorder %s106, %s107
      %p121 = scmp.eq.s32.totalorder %s26, 1
      %p122 = por %p120, %p121
      %p124 = scmp.ne.s32.totalorder %s107, %s123
      %p125 = scmp.eq.s32.totalorder %s26, 0
      %p126 = por %p124, %p125
      %p127 = scmp.le.s32.totalorder 1, %s20
      %p128 = scmp.lt.s32.totalorder %s20, 3
      %p129 = pnand %p127, %p128
      %p130 = pneg %p129
      // Predicated region
      $region9: #{series_decomp.1} parent=5 // pred_check
        _
      $region10: #{series_decomp.1} parent=5 // pred_check_branch
        %132 = sbr.rel (%p129) target = $region12
      $region11: #{series_decomp.1} parent=5 // pred_region
        %s133 = ssub.s32 %s20, 1
        // Predicated region
        $region13: #{series_decomp.1} parent=11 // pred_check
          %p134 = pneg %p41
        $region14: #{series_decomp.1} parent=11 // pred_check_branch
          %136 = sbr.rel (%p134) target = $region16
        $region15: #{series_decomp.1} parent=11 // pred_region
          %s138 = ssub.s32 1536, 1536
          %139 = vsyncadd [#allocation3], %s138
          %s140 = sshll.u32 [#allocation2], 4
          %s141 = int_to_ptr.vmem [resolvable:$true] %s140
          %146 = dma.hbm_to_vmem [thread:$0]  %s0, 1536, %s141, [#allocation3], 128, 128, 8
        $region16: #{series_decomp.1} parent=11 // pred_fallthru
          _
      $region12: #{series_decomp.1} parent=5 // pred_fallthru
        _
      %p147 = scmp.lt.s32.totalorder %s20, 2
      // Predicated region
      $region17: #{series_decomp.1} parent=5 // pred_check
        %p148 = pneg %p147
      $region18: #{series_decomp.1} parent=5 // pred_check_branch
        %150 = sbr.rel (%p148) target = $region20
      $region19: #{series_decomp.1} parent=5 // pred_region
        // Predicated region
        $region21: #{series_decomp.1} parent=19 // pred_check
          %p151 = pneg %p61
        $region22: #{series_decomp.1} parent=19 // pred_check_branch
          %153 = sbr.rel (%p151) target = $region24
        $region23: #{series_decomp.1} parent=19 // pred_region
          %s154 = sand.u32 %s51, 1
          %s155 = scalar_lea.sflag [#allocation6], %s154
          %s156 = sand.u32 %s51, 1
          %s157 = smul.addr %s156, 96
          %s158 = scalar_lea.vmem [#allocation5], %s157
          %s160 = ssub.s32 1536, 1536
          %161 = vsyncadd %s155, %s160
          %s162 = smul.addr %s20, 12
          %s163 = smul.addr %s162, 128
          %s164 = scalar_lea.hbm %s1, %s163
          %s165 = sshll.u32 %s158, 4
          %s166 = int_to_ptr.vmem [resolvable:$true] %s165
          %171 = dma.hbm_to_vmem [thread:$0]  %s164, 1536, %s166, %s155, 128, 128, 8
        $region24: #{series_decomp.1} parent=19 // pred_fallthru
          _
      $region20: #{series_decomp.1} parent=5 // pred_fallthru
        _
      %p172 = scmp.le.s32.totalorder 1, %s20
      %p173 = scmp.lt.s32.totalorder %s20, 3
      %p174 = pnand %p172, %p173
      %p175 = pneg %p174
      // Predicated region
      $region25: #{series_decomp.1} parent=5 // pred_check
        _
      $region26: #{series_decomp.1} parent=5 // pred_check_branch
        %177 = sbr.rel (%p174) target = $region28
      $region27: #{series_decomp.1} parent=5 // pred_region
        %s178 = ssub.s32 %s20, 1
        // Predicated region
        $region29: #{series_decomp.1} parent=27 // pred_check
          %p179 = pneg %p41
        $region30: #{series_decomp.1} parent=27 // pred_check_branch
          %181 = sbr.rel (%p179) target = $region32
        $region31: #{series_decomp.1} parent=27 // pred_region
          %182 = dma.done [#allocation3], 1536
        $region32: #{series_decomp.1} parent=27 // pred_fallthru
          _
        %s183 = sand.u32 %s54, 1
        %s184 = scalar_lea.sflag [#allocation6], %s183
        %s185 = sand.u32 %s54, 1
        %s186 = smul.addr %s185, 96
        %s187 = scalar_lea.vmem [#allocation5], %s186
        // Predicated region
        $region33: #{series_decomp.1} parent=27 // pred_check
          %p188 = pneg %p67
        $region34: #{series_decomp.1} parent=27 // pred_check_branch
          %190 = sbr.rel (%p188) target = $region36
        $region35: #{series_decomp.1} parent=27 // pred_region
          %191 = dma.done %s184, 1536
        $region36: #{series_decomp.1} parent=27 // pred_fallthru
          _
        %p192 = pneg %p41
        %p193 = pneg %p38
        %s194 = sand.u32 %s54, 1
        %s195 = scalar_lea.sflag [#allocation6], %s194
        %s196 = sand.u32 %s54, 1
        %s197 = smul.addr %s196, 96
        %s198 = scalar_lea.vmem [#allocation5], %s197
        %p199 = pneg %p67
        %p200 = pneg %p64
        %p201 = pneg %p93
        %p202 = pneg %p90
        %s203 = sand.u32 %s80, 1
        %s204 = scalar_lea.sflag [#allocation4], %s203
        %s205 = sand.u32 %s80, 1
        %s206 = smul.addr %s205, 96
        %s207 = scalar_lea.vmem [#allocation7], %s206
        %p208 = pneg %p119
        %p209 = pneg %p116
        %s210 = sand.u32 %s106, 1
        %s211 = scalar_lea.sflag [#allocation9], %s210
        %s212 = sand.u32 %s106, 1
        %s213 = smul.addr %s212, 96
        %s214 = scalar_lea.vmem [#allocation8], %s213
        %v215 = vld [vmem:[%s187] sm:$0xff]
        %v216 = vld [vmem:[%s187 + $0x8] sm:$0xff]
        %v217 = vld [vmem:[%s187 + $0x10] sm:$0xff]
        %v218 = vld [vmem:[%s187 + $0x18] sm:$0xff]
        %v219 = vld [vmem:[%s187 + $0x20] sm:$0xff]
        %v220 = vld [vmem:[%s187 + $0x28] sm:$0xff]
        %v221 = vld [vmem:[%s187 + $0x30] sm:$0xff]
        %v222 = vld [vmem:[%s187 + $0x38] sm:$0xff]
        %v223 = vld [vmem:[%s187 + $0x40] sm:$0xff]
        %v224 = vld [vmem:[%s187 + $0x48] sm:$0xff]
        %v225 = vld [vmem:[%s187 + $0x50] sm:$0xff]
        %v226 = vld [vmem:[%s187 + $0x58] sm:$0xff]
        %v227 = vld [vmem:[#allocation2] sm:$0xff]
        %v228 = vld [vmem:[#allocation2 + $0x8] sm:$0xff]
        %v229 = vld [vmem:[#allocation2 + $0x10] sm:$0xff]
        %v230 = vld [vmem:[#allocation2 + $0x18] sm:$0xff]
        %v231 = vld [vmem:[#allocation2 + $0x20] sm:$0xff]
        %v232 = vld [vmem:[#allocation2 + $0x28] sm:$0xff]
        %v233 = vld [vmem:[#allocation2 + $0x30] sm:$0xff]
        %v234 = vld [vmem:[#allocation2 + $0x38] sm:$0xff]
        %v235 = vld [vmem:[#allocation2 + $0x40] sm:$0xff]
        %v236 = vld [vmem:[#allocation2 + $0x48] sm:$0xff]
        %v237 = vld [vmem:[#allocation2 + $0x50] sm:$0xff]
        %v238 = vld [vmem:[#allocation2 + $0x58] sm:$0xff]
        %vm239 = vcmask 785408
        %v241 = vsel %vm239, %v227, 0
        %v244 = vsel %vm239, %v228, 0
        %v247 = vsel %vm239, %v229, 0
        %v250 = vsel %vm239, %v230, 0
        %v253 = vsel %vm239, %v231, 0
        %v256 = vsel %vm239, %v232, 0
        %v259 = vsel %vm239, %v233, 0
        %v262 = vsel %vm239, %v234, 0
        %v265 = vsel %vm239, %v235, 0
        %v268 = vsel %vm239, %v236, 0
        %v271 = vsel %vm239, %v237, 0
        %v274 = vsel %vm239, %v238, 0
        %276 = vmatprep.subr.mxu0 0.0
        %277 = vmatpush1.msra.mxu0 %v215
        %278 = vmatprep.subr.mxu0 0.0
        %279 = vmatpush1.msra.mxu0 %v216
        %280 = vmatprep.subr.mxu0 0.0
        %281 = vmatpush1.msra.mxu0 %v217
        %282 = vmatprep.subr.mxu0 0.0
        %283 = vmatpush1.msra.mxu0 %v218
        %284 = vmatprep.subr.mxu0 0.0
        %285 = vmatpush1.msra.mxu0 %v219
        %286 = vmatprep.subr.mxu0 0.0
        %287 = vmatpush1.msra.mxu0 %v220
        %288 = vmatprep.subr.mxu0 0.0
        %289 = vmatpush1.msra.mxu0 %v221
        %290 = vmatprep.subr.mxu0 0.0
        %291 = vmatpush1.msra.mxu0 %v222
        %292 = vmatprep.subr.mxu0 0.0
        %293 = vmatpush1.msra.mxu0 %v223
        %294 = vmatprep.subr.mxu0 0.0
        %295 = vmatpush1.msra.mxu0 %v224
        %296 = vmatprep.subr.mxu0 0.0
        %297 = vmatpush1.msra.mxu0 %v225
        %298 = vmatprep.subr.mxu0 0.0
        %299 = vmatpush1.msra.mxu0 %v226
        %300 = vmatprep.subr.mxu0 0.0
        %301 = vmatpush1.msra.mxu0 0.0
        %302 = vmatprep.subr.mxu0 0.0
        %303 = vmatpush1.msra.mxu0 0.0
        %304 = vmatprep.subr.mxu0 0.0
        %305 = vmatpush1.msra.mxu0 0.0
        %306 = vmatprep.subr.mxu0 0.0
        %307 = vmatpush1.msra.mxu0 0.0
        %308 = vmatprep.subr.mxu0 0.0
        %309 = vmatpush1.msra.mxu0 0.0
        %310 = vmatprep.subr.mxu0 0.0
        %311 = vmatpush1.msra.mxu0 0.0
        %312 = vmatprep.subr.mxu0 0.0
        %313 = vmatpush1.msra.mxu0 0.0
        %314 = vmatprep.subr.mxu0 0.0
        %315 = vmatpush1.msra.mxu0 0.0
        %316 = vmatprep.subr.mxu0 0.0
        %317 = vmatpush1.msra.mxu0 0.0
        %318 = vmatprep.subr.mxu0 0.0
        %319 = vmatpush1.msra.mxu0 0.0
        %320 = vmatprep.subr.mxu0 0.0
        %321 = vmatpush1.msra.mxu0 0.0
        %322 = vmatprep.subr.mxu0 0.0
        %323 = vmatpush1.msra.mxu0 0.0
        %324 = vmatprep.subr.mxu0 0.0
        %325 = vmatpush1.msra.mxu0 0.0
        %326 = vmatprep.subr.mxu0 0.0
        %327 = vmatpush1.msra.mxu0 0.0
        %328 = vmatprep.subr.mxu0 0.0
        %329 = vmatpush1.msra.mxu0 0.0
        %330 = vmatprep.subr.mxu0 0.0
        %331 = vmatpush1.msra.mxu0 0.0
        %332 = vmatprep.subr.mxu0 0.0
        %333 = vmatpush1.msra.mxu0 0.0
        %334 = vmatprep.subr.mxu0 0.0
        %335 = vmatpush1.msra.mxu0 0.0
        %336 = vmatprep.subr.mxu0 0.0
        %337 = vmatpush1.msra.mxu0 0.0
        %338 = vmatprep.subr.mxu0 0.0
        %339 = vmatpush1.msra.mxu0 0.0
        %340 = vmatprep.mubr.f32.mxu0 0.0
        %341 = vmatmul.mubr.f32.gmra.mrb[0].mxu0 %v241
        %v342 = vpop.f32.mrb[0].mxu0
        %v343 = vadd.f32 0.0, %v342
        %v344 = vpop.f32.mrb[0].mxu0
        %345 = vmatprep.mubr.f32.mxu0 0.0
        %346 = vmatmul.mubr.f32.gmra.mrb[0].mxu0 %v244
        %v347 = vpop.f32.mrb[0].mxu0
        %v348 = vadd.f32 0.0, %v347
        %v349 = vpop.f32.mrb[0].mxu0
        %350 = vmatprep.mubr.f32.mxu0 0.0
        %351 = vmatmul.mubr.f32.gmra.mrb[0].mxu0 %v247
        %v352 = vpop.f32.mrb[0].mxu0
        %v353 = vadd.f32 0.0, %v352
        %v354 = vpop.f32.mrb[0].mxu0
        %355 = vmatprep.mubr.f32.mxu0 0.0
        %356 = vmatmul.mubr.f32.gmra.mrb[0].mxu0 %v250
        %v357 = vpop.f32.mrb[0].mxu0
        %v358 = vadd.f32 0.0, %v357
        %v359 = vpop.f32.mrb[0].mxu0
        %360 = vmatprep.mubr.f32.mxu0 0.0
        %361 = vmatmul.mubr.f32.gmra.mrb[0].mxu0 %v253
        %v362 = vpop.f32.mrb[0].mxu0
        %v363 = vadd.f32 0.0, %v362
        %v364 = vpop.f32.mrb[0].mxu0
        %365 = vmatprep.mubr.f32.mxu0 0.0
        %366 = vmatmul.mubr.f32.gmra.mrb[0].mxu0 %v256
        %v367 = vpop.f32.mrb[0].mxu0
        %v368 = vadd.f32 0.0, %v367
        %v369 = vpop.f32.mrb[0].mxu0
        %370 = vmatprep.mubr.f32.mxu0 0.0
        %371 = vmatmul.mubr.f32.gmra.mrb[0].mxu0 %v259
        %v372 = vpop.f32.mrb[0].mxu0
        %v373 = vadd.f32 0.0, %v372
        %v374 = vpop.f32.mrb[0].mxu0
        %375 = vmatprep.mubr.f32.mxu0 0.0
        %376 = vmatmul.mubr.f32.gmra.mrb[0].mxu0 %v262
        %v377 = vpop.f32.mrb[0].mxu0
        %v378 = vadd.f32 0.0, %v377
        %v379 = vpop.f32.mrb[0].mxu0
        %380 = vmatprep.mubr.f32.mxu0 0.0
        %381 = vmatmul.mubr.f32.gmra.mrb[0].mxu0 %v265
        %v382 = vpop.f32.mrb[0].mxu0
        %v383 = vadd.f32 0.0, %v382
        %v384 = vpop.f32.mrb[0].mxu0
        %385 = vmatprep.mubr.f32.mxu0 0.0
        %386 = vmatmul.mubr.f32.gmra.mrb[0].mxu0 %v268
        %v387 = vpop.f32.mrb[0].mxu0
        %v388 = vadd.f32 0.0, %v387
        %v389 = vpop.f32.mrb[0].mxu0
        %390 = vmatprep.mubr.f32.mxu0 0.0
        %391 = vmatmul.mubr.f32.gmra.mrb[0].mxu0 %v271
        %v392 = vpop.f32.mrb[0].mxu0
        %v393 = vadd.f32 0.0, %v392
        %v394 = vpop.f32.mrb[0].mxu0
        %395 = vmatprep.mubr.f32.mxu0 0.0
        %396 = vmatmul.mubr.f32.gmra.mrb[0].mxu0 %v274
        %v397 = vpop.f32.mrb[0].mxu0
        %v398 = vadd.f32 0.0, %v397
        %v399 = vpop.f32.mrb[0].mxu0
        %400 = vdwg.mxu0
        %401 = vst [vmem:[%s214] sm:$0xff] %v343
        %402 = vst [vmem:[%s214 + $0x8] sm:$0xff] %v348
        %403 = vst [vmem:[%s214 + $0x10] sm:$0xff] %v353
        %404 = vst [vmem:[%s214 + $0x18] sm:$0xff] %v358
        %405 = vst [vmem:[%s214 + $0x20] sm:$0xff] %v363
        %406 = vst [vmem:[%s214 + $0x28] sm:$0xff] %v368
        %407 = vst [vmem:[%s214 + $0x30] sm:$0xff] %v373
        %408 = vst [vmem:[%s214 + $0x38] sm:$0xff] %v378
        %409 = vst [vmem:[%s214 + $0x40] sm:$0xff] %v383
        %410 = vst [vmem:[%s214 + $0x48] sm:$0xff] %v388
        %411 = vst [vmem:[%s214 + $0x50] sm:$0xff] %v393
        %412 = vst [vmem:[%s214 + $0x58] sm:$0xff] %v398
        %v413 = vsub.f32 %v215, %v343
        %v414 = vsub.f32 %v216, %v348
        %v415 = vsub.f32 %v217, %v353
        %v416 = vsub.f32 %v218, %v358
        %v417 = vsub.f32 %v219, %v363
        %v418 = vsub.f32 %v220, %v368
        %v419 = vsub.f32 %v221, %v373
        %v420 = vsub.f32 %v222, %v378
        %v421 = vsub.f32 %v223, %v383
        %v422 = vsub.f32 %v224, %v388
        %v423 = vsub.f32 %v225, %v393
        %v424 = vsub.f32 %v226, %v398
        %425 = vst [vmem:[%s207] sm:$0xff] %v413
        %426 = vst [vmem:[%s207 + $0x8] sm:$0xff] %v414
        %427 = vst [vmem:[%s207 + $0x10] sm:$0xff] %v415
        %428 = vst [vmem:[%s207 + $0x18] sm:$0xff] %v416
        %429 = vst [vmem:[%s207 + $0x20] sm:$0xff] %v417
        %430 = vst [vmem:[%s207 + $0x28] sm:$0xff] %v418
        %431 = vst [vmem:[%s207 + $0x30] sm:$0xff] %v419
        %432 = vst [vmem:[%s207 + $0x38] sm:$0xff] %v420
        %433 = vst [vmem:[%s207 + $0x40] sm:$0xff] %v421
        %434 = vst [vmem:[%s207 + $0x48] sm:$0xff] %v422
        %435 = vst [vmem:[%s207 + $0x50] sm:$0xff] %v423
        %436 = vst [vmem:[%s207 + $0x58] sm:$0xff] %v424
        %s437 = sand.u32 %s80, 1
        %s438 = scalar_lea.sflag [#allocation4], %s437
        %s439 = sand.u32 %s80, 1
        %s440 = smul.addr %s439, 96
        %s441 = scalar_lea.vmem [#allocation7], %s440
        %s442 = sand.u32 %s106, 1
        %s443 = scalar_lea.sflag [#allocation9], %s442
        %s444 = sand.u32 %s106, 1
        %s445 = smul.addr %s444, 96
        %s446 = scalar_lea.vmem [#allocation8], %s445
        // Predicated region
        $region37: #{series_decomp.1} parent=27 // pred_check
          %p447 = pneg %p90
        $region38: #{series_decomp.1} parent=27 // pred_check_branch
          %449 = sbr.rel (%p447) target = $region40
        $region39: #{series_decomp.1} parent=27 // pred_region
          %s451 = ssub.s32 1536, 1536
          %452 = vsyncadd %s438, %s451
          %s453 = smul.addr %s25, 12
          %s454 = smul.addr %s453, 128
          %s455 = scalar_lea.hbm %s2, %s454
          %s456 = sshll.u32 %s441, 4
          %s457 = int_to_ptr.vmem [resolvable:$true] %s456
          %462 = dma.vmem_to_hbm [thread:$0]  %s457, 1536, %s455, %s438, 128, 128, 8
        $region40: #{series_decomp.1} parent=27 // pred_fallthru
          _
        // Predicated region
        $region41: #{series_decomp.1} parent=27 // pred_check
          %p463 = pneg %p116
        $region42: #{series_decomp.1} parent=27 // pred_check_branch
          %465 = sbr.rel (%p463) target = $region44
        $region43: #{series_decomp.1} parent=27 // pred_region
          %s467 = ssub.s32 1536, 1536
          %468 = vsyncadd %s443, %s467
          %s469 = smul.addr %s25, 12
          %s470 = smul.addr %s469, 128
          %s471 = scalar_lea.hbm %s3, %s470
          %s472 = sshll.u32 %s446, 4
          %s473 = int_to_ptr.vmem [resolvable:$true] %s472
          %478 = dma.vmem_to_hbm [thread:$0]  %s473, 1536, %s471, %s443, 128, 128, 8
        $region44: #{series_decomp.1} parent=27 // pred_fallthru
          _
      $region28: #{series_decomp.1} parent=5 // pred_fallthru
        _
      %p479 = scmp.le.s32.totalorder 2, %s20
      // Predicated region
      $region45: #{series_decomp.1} parent=5 // pred_check
        %p480 = pneg %p479
      $region46: #{series_decomp.1} parent=5 // pred_check_branch
        %482 = sbr.rel (%p480) target = $region48
      $region47: #{series_decomp.1} parent=5 // pred_region
        %s483 = ssub.s32 %s20, 2
        // Predicated region
        $region49: #{series_decomp.1} parent=47 // pred_check
          %p484 = pneg %p96
        $region50: #{series_decomp.1} parent=47 // pred_check_branch
          %486 = sbr.rel (%p484) target = $region52
        $region51: #{series_decomp.1} parent=47 // pred_region
          %s487 = sand.u32 %s81, 1
          %s488 = scalar_lea.sflag [#allocation4], %s487
          %s489 = sand.u32 %s81, 1
          %s490 = smul.addr %s489, 96
          %s491 = scalar_lea.vmem [#allocation7], %s490
          %492 = dma.done %s488, 1536
        $region52: #{series_decomp.1} parent=47 // pred_fallthru
          _
        // Predicated region
        $region53: #{series_decomp.1} parent=47 // pred_check
          %p493 = pneg %p122
        $region54: #{series_decomp.1} parent=47 // pred_check_branch
          %495 = sbr.rel (%p493) target = $region56
        $region55: #{series_decomp.1} parent=47 // pred_region
          %s496 = sand.u32 %s107, 1
          %s497 = scalar_lea.sflag [#allocation9], %s496
          %s498 = sand.u32 %s107, 1
          %s499 = smul.addr %s498, 96
          %s500 = scalar_lea.vmem [#allocation8], %s499
          %501 = dma.done %s497, 1536
        $region56: #{series_decomp.1} parent=47 // pred_fallthru
          _
      $region48: #{series_decomp.1} parent=5 // pred_fallthru
        _
    $region6: #{series_decomp.1} parent=1 // loop_footer
      %s24 = sadd.s32 1, %s20
    $region7: #{series_decomp.1} parent=1 // loop_footer_branch
      %19 = sbr.rel target = $region3
    $region8: #{series_decomp.1} parent=1 // loop_exit
      _
    %502 = vsyncpa [#allocation3], 1
    %s503 = scalar_lea.sflag [#allocation3], 1
    %504 = vsyncpa %s503, 1
    %505 = vsyncpa [#allocation6], 1
    %s506 = scalar_lea.sflag [#allocation6], 1
    %507 = vsyncpa %s506, 1
    %508 = vsyncpa [#allocation4], 1
    %s509 = scalar_lea.sflag [#allocation4], 1
    %510 = vsyncpa %s509, 1
    %511 = vsyncpa [#allocation9], 1
    %s512 = scalar_lea.sflag [#allocation9], 1
    %513 = vsyncpa %s512, 1

</llo_original>
